<compile_context>
chip_gen: v7x
topology: tpu7x:2x2x1
jax: 0.10.0
libtpu: 0.0.40
codegen_flags: <defaults>
</compile_context>

<pallas_src>
import jax
import jax.numpy as jnp
from jax.experimental import pallas as pl
from jax.experimental.pallas import tpu as pltpu


_OUT_PAD = 8  # fc2 has 3 real outputs; pad to 8 lanes (full-array last dim)


def _aggregate_two_layer_kernel(x_ref, w1_ref, b1_ref, w2_ref, b2_ref, o_ref):
    # In-kernel cast to the matmul dtype (bf16 by default); VPU work hidden
    # under the DMA in this memory-bound regime.
    x = x_ref[...].astype(w1_ref.dtype)
    # h = relu(x @ W1 + b1), accumulate in f32 on the MXU.
    h = jnp.dot(x, w1_ref[...], preferred_element_type=jnp.float32)
    h = jnp.maximum(h + b1_ref[...], 0.0)
    # out = h @ W2p + b2p  (W2p/b2p are zero-padded to 8 lanes)
    o = jnp.dot(h.astype(w2_ref.dtype), w2_ref[...],
                preferred_element_type=jnp.float32)
    o_ref[...] = (o + b2_ref[...]).astype(o_ref.dtype)


def _aggregate_one_layer_kernel(x_ref, w2_ref, b2_ref, o_ref):
    x = x_ref[...].astype(w2_ref.dtype)
    o = jnp.dot(x, w2_ref[...], preferred_element_type=jnp.float32)
    o_ref[...] = (o + b2_ref[...]).astype(o_ref.dtype)


def _round_up(x, m):
    return ((x + m - 1) // m) * m


def prepare_params(params, layer, *, use_bf16=True):
    """One-time weight preparation (pad fc2 to 8 lanes, cast to matmul dtype).

    params: dict with 'w1' (C, C), 'b1' (1, C), 'w2' (C, 3), 'b2' (1, 3);
            weights stored transposed vs. PyTorch, i.e. (in, out).
    Returns a dict to feed to aggregate_forward; do NOT rebuild it per call.
    """
    mm_dtype = jnp.bfloat16 if use_bf16 else jnp.float32
    w2 = params["w2"]
    b2 = params["b2"]
    n_out = int(w2.shape[1])
    prepped = {
        "w2p": jnp.pad(w2, ((0, 0), (0, _OUT_PAD - n_out))).astype(mm_dtype),
        "b2p": jnp.pad(b2, ((0, 0), (0, _OUT_PAD - n_out))).astype(jnp.float32),
        "n_out": n_out,
    }
    if layer != 1:
        prepped["w1"] = params["w1"].astype(mm_dtype)
        prepped["b1"] = params["b1"].astype(jnp.float32)
    return prepped


def aggregate_forward(x, prepped, layer, *, tm=2048):
    """Forward pass of Aggregate.

    x:       (batch, num_concepts) float32 (passed to the kernel uncast).
    prepped: output of prepare_params().
    layer:   args.layer from the PyTorch module.
    """
    B, C = x.shape
    out_dtype = x.dtype
    n_out = prepped["n_out"]

    # --- batch tiling --------------------------------------------------------
    # Cap TM so the grid has >= ~4 steps for moderate batches (keeps both
    # TensorCores busy on v7x); only the ragged tail of the batch is padded.
    tm = max(8, (tm // 8) * 8)
    b8 = _round_up(max(B, 1), 8)
    tm_mc = max(8, _round_up((b8 + 3) // 4, 8))
    TM = min(tm, tm_mc)
    Bp = _round_up(B, TM)
    xp = x if Bp == B else jnp.pad(x, ((0, Bp - B), (0, 0)))

    grid = (Bp // TM,)
    x_spec = pl.BlockSpec((TM, C), lambda i: (i, 0))
    out_spec = pl.BlockSpec((TM, _OUT_PAD), lambda i: (i, 0))
    out_shape = jax.ShapeDtypeStruct((Bp, _OUT_PAD), out_dtype)

    def resident(a):  # weights/biases: same block every step -> VMEM-resident
        return pl.BlockSpec(a.shape, lambda i: (0,) * a.ndim)

    if layer != 1:
        args = (xp, prepped["w1"], prepped["b1"], prepped["w2p"], prepped["b2p"])
        kernel = _aggregate_two_layer_kernel
        in_specs = [x_spec, resident(prepped["w1"]), resident(prepped["b1"]),
                    resident(prepped["w2p"]), resident(prepped["b2p"])]
        flops = 2 * B * C * C + 2 * B * C * n_out
    else:
        args = (xp, prepped["w2p"], prepped["b2p"])
        kernel = _aggregate_one_layer_kernel
        in_specs = [x_spec, resident(prepped["w2p"]), resident(prepped["b2p"])]
        flops = 2 * B * C * n_out

    # --- VMEM budget / cost estimate ----------------------------------------
    weight_bytes = sum(int(a.size) * a.dtype.itemsize for a in args[1:])
    tile_bytes = TM * C * x.dtype.itemsize + TM * _OUT_PAD * jnp.dtype(out_dtype).itemsize
    est_vmem = 2 * tile_bytes + 2 * weight_bytes + (2 << 20)
    vmem_limit = int(min(max(est_vmem, 32 << 20), 64 << 20))

    bytes_accessed = (int(x.size) * x.dtype.itemsize + weight_bytes
                      + B * n_out * jnp.dtype(out_dtype).itemsize)
    cost = pl.CostEstimate(flops=flops, transcendentals=0,
                           bytes_accessed=bytes_accessed)

    out_padded = pl.pallas_call(
        kernel,
        out_shape=out_shape,
        grid=grid,
        in_specs=in_specs,
        out_specs=out_spec,
        compiler_params=pltpu.CompilerParams(
            dimension_semantics=("parallel",),
            vmem_limit_bytes=vmem_limit),
        cost_estimate=cost,
    )(*args)

    # Strip batch padding and lane padding outside the kernel.
    return out_padded[:B, :n_out]


def init_params(key, num_concepts):
    """Deterministic synthetic parameters (PyTorch-Linear-like uniform init)."""
    k1, k2, k3, k4 = jax.random.split(key, 4)
    bound1 = 1.0 / jnp.sqrt(num_concepts)
    w1 = jax.random.uniform(k1, (num_concepts, num_concepts),
                            minval=-bound1, maxval=bound1, dtype=jnp.float32)
    b1 = jax.random.uniform(k2, (1, num_concepts),
                            minval=-bound1, maxval=bound1, dtype=jnp.float32)
    w2 = jax.random.uniform(k3, (num_concepts, 3),
                            minval=-bound1, maxval=bound1, dtype=jnp.float32)
    b2 = jax.random.uniform(k4, (1, 3),
                            minval=-bound1, maxval=bound1, dtype=jnp.float32)
    return {"w1": w1, "b1": b1, "w2": w2, "b2": b2}


def reference_forward(x, params, layer):
    """Pure-JAX reference for correctness check (f32 throughout)."""
    h = x
    if layer != 1:
        h = jnp.maximum(h @ params["w1"] + params["b1"], 0.0)
    return h @ params["w2"] + params["b2"]


if __name__ == "__main__":
    key = jax.random.PRNGKey(0)
    kx, kp = jax.random.split(key)

    batch = 8
    num_concepts = 32

    x = jax.random.normal(kx, (batch, num_concepts), dtype=jnp.float32)
    params = init_params(kp, num_concepts)

    # One-time weight prep (hoisted out of the forward call).
    prepped_f32_2 = prepare_params(params, 2, use_bf16=False)
    prepped_bf16_2 = prepare_params(params, 2, use_bf16=True)
    prepped_bf16_1 = prepare_params(params, 1, use_bf16=True)

    # Two-layer path (args.layer != 1), f32 matmul path: exact check.
    out2_f32 = jax.block_until_ready(aggregate_forward(x, prepped_f32_2, 2))
    ref2 = reference_forward(x, params, 2)
    assert out2_f32.shape == (batch, 3)
    assert jnp.allclose(out2_f32, ref2, atol=1e-5, rtol=1e-5)

    # Two-layer path, default bf16 matmul inputs (f32 accumulation, f32 output).
    out2 = jax.block_until_ready(aggregate_forward(x, prepped_bf16_2, 2))
    assert out2.shape == (batch, 3)
    assert jnp.allclose(out2, ref2, atol=5e-2, rtol=5e-2)

    # Single-layer path (args.layer == 1): only fc2.
    out1 = jax.block_until_ready(aggregate_forward(x, prepped_bf16_1, 1))
    ref1 = reference_forward(x, params, 1)
    assert out1.shape == (batch, 3)
    assert jnp.allclose(out1, ref1, atol=5e-2, rtol=5e-2)

    # Larger, non-multiple-of-tile batch: exercises ragged-tail batch padding,
    # the multi-step tiled grid (>= 4 steps -> both v7x TCs), and the 8-lane
    # padded output writeback.
    xb = jax.random.normal(jax.random.PRNGKey(1), (1000, num_concepts),
                           dtype=jnp.float32)
    outb = jax.block_until_ready(aggregate_forward(xb, prepped_bf16_2, 2))
    refb = reference_forward(xb, params, 2)
    assert outb.shape == (1000, 3)
    assert jnp.allclose(outb, refb, atol=5e-2, rtol=5e-2)

    print("KERNEL_OK")
</pallas_src>

<mosaic_0001>
module attributes {stable_mosaic.version = 11 : i64} {
  func.func @_aggregate_two_layer_kernel(%arg0: i32, %arg1: memref<8x32xf32, #tpu.memory_space<vmem>>, %arg2: memref<32x32xf32, #tpu.memory_space<vmem>>, %arg3: memref<1x32xf32, #tpu.memory_space<vmem>>, %arg4: memref<32x8xf32, #tpu.memory_space<vmem>>, %arg5: memref<1x8xf32, #tpu.memory_space<vmem>>, %arg6: memref<8x8xf32, #tpu.memory_space<vmem>>) attributes {dimension_semantics = [#tpu.dimension_semantics<parallel>], iteration_bounds = array<i64: 1>, scalar_prefetch = 0 : i64, scratch_operands = 0 : i64, tpu.core_type = #tpu.core_type<tc>, window_params = [{transform_indices = @transform_0, window_bounds = array<i64: 8, 32>}, {pipeline_mode = #tpu.pipeline_mode<synchronous>, transform_indices = @transform_1, window_bounds = array<i64: 32, 32>}, {pipeline_mode = #tpu.pipeline_mode<synchronous>, transform_indices = @transform_2, window_bounds = array<i64: 1, 32>}, {pipeline_mode = #tpu.pipeline_mode<synchronous>, transform_indices = @transform_3, window_bounds = array<i64: 32, 8>}, {pipeline_mode = #tpu.pipeline_mode<synchronous>, transform_indices = @transform_4, window_bounds = array<i64: 1, 8>}, {transform_indices = @transform_5, window_bounds = array<i64: 8, 8>}]} {
    %c0 = arith.constant 0 : index
    %c0_0 = arith.constant 0 : index
    %0 = vector.load %arg1[%c0, %c0_0] : memref<8x32xf32, #tpu.memory_space<vmem>>, vector<8x32xf32>
    %c0_1 = arith.constant 0 : index
    %c0_2 = arith.constant 0 : index
    %1 = vector.load %arg2[%c0_1, %c0_2] : memref<32x32xf32, #tpu.memory_space<vmem>>, vector<32x32xf32>
    %cst = arith.constant dense<0.000000e+00> : vector<8x32xf32>
    %2 = tpu.matmul %0, %1, %cst {dimension_numbers = #tpu.dot_dimension_numbers<[1], [0], [0], [1], [0, 0, 1, 1], [], []>} : vector<8x32xf32>, vector<32x32xf32>, vector<8x32xf32> -> vector<8x32xf32>
    %c0_3 = arith.constant 0 : index
    %c0_4 = arith.constant 0 : index
    %3 = vector.load %arg3[%c0_3, %c0_4] : memref<1x32xf32, #tpu.memory_space<vmem>>, vector<1x32xf32>
    %4 = vector.broadcast %3 : vector<1x32xf32> to vector<8x32xf32>
    %5 = arith.addf %2, %4 : vector<8x32xf32>
    %cst_5 = arith.constant 0.000000e+00 : f32
    %6 = vector.broadcast %cst_5 : f32 to vector<8x32xf32>
    %7 = arith.maximumf %5, %6 : vector<8x32xf32>
    %c0_6 = arith.constant 0 : index
    %c0_7 = arith.constant 0 : index
    %8 = vector.load %arg4[%c0_6, %c0_7] : memref<32x8xf32, #tpu.memory_space<vmem>>, vector<32x8xf32>
    %cst_8 = arith.constant dense<0.000000e+00> : vector<8x8xf32>
    %9 = tpu.matmul %7, %8, %cst_8 {dimension_numbers = #tpu.dot_dimension_numbers<[1], [0], [0], [1], [0, 0, 1, 1], [], []>} : vector<8x32xf32>, vector<32x8xf32>, vector<8x8xf32> -> vector<8x8xf32>
    %c0_9 = arith.constant 0 : index
    %c0_10 = arith.constant 0 : index
    %10 = vector.load %arg5[%c0_9, %c0_10] : memref<1x8xf32, #tpu.memory_space<vmem>>, vector<1x8xf32>
    %11 = vector.broadcast %10 : vector<1x8xf32> to vector<8x8xf32>
    %12 = arith.addf %9, %11 : vector<8x8xf32>
    %c0_11 = arith.constant 0 : index
    %c0_12 = arith.constant 0 : index
    %13 = vector.load %arg6[%c0_11, %c0_12] : memref<8x8xf32, #tpu.memory_space<vmem>>, vector<8x8xf32>
    tpu.vector_store %arg6[%c0_11, %c0_12], %12 {strides = array<i32>} : memref<8x8xf32, #tpu.memory_space<vmem>>, vector<8x8xf32>,
    return
  }
  func.func @transform_0(%arg0: i32) -> (i32, i32) {
    %c0_i32 = arith.constant 0 : i32
    %c0_i32_0 = arith.constant 0 : i32
    return %arg0, %c0_i32 : i32, i32
  }
  func.func @transform_1(%arg0: i32) -> (i32, i32) {
    %c0_i32 = arith.constant 0 : i32
    %c0_i32_0 = arith.constant 0 : i32
    %c0_i32_1 = arith.constant 0 : i32
    return %c0_i32, %c0_i32_0 : i32, i32
  }
  func.func @transform_2(%arg0: i32) -> (i32, i32) {
    %c0_i32 = arith.constant 0 : i32
    %c0_i32_0 = arith.constant 0 : i32
    %c0_i32_1 = arith.constant 0 : i32
    return %c0_i32, %c0_i32_0 : i32, i32
  }
  func.func @transform_3(%arg0: i32) -> (i32, i32) {
    %c0_i32 = arith.constant 0 : i32
    %c0_i32_0 = arith.constant 0 : i32
    %c0_i32_1 = arith.constant 0 : i32
    return %c0_i32, %c0_i32_0 : i32, i32
  }
  func.func @transform_4(%arg0: i32) -> (i32, i32) {
    %c0_i32 = arith.constant 0 : i32
    %c0_i32_0 = arith.constant 0 : i32
    %c0_i32_1 = arith.constant 0 : i32
    return %c0_i32, %c0_i32_0 : i32, i32
  }
  func.func @transform_5(%arg0: i32) -> (i32, i32) {
    %c0_i32 = arith.constant 0 : i32
    %c0_i32_0 = arith.constant 0 : i32
    return %arg0, %c0_i32 : i32, i32
  }
}

</mosaic_0001>

<llo_original>
// kernel: tpu_custom_call.1
$region0: #{tpu_custom_call.1}
  #allocation0 [shape = 'u32[]', space=smem, size = 0x4, offset = 0x4, fixed_abs, tag = 'smem constant byte address 0x4 - core index']
  #allocation1 [shape = 'u32[144,128]{1,0:T(1,128)}', space=vmem, size = 0x12000, scoped, tag = 'internal scratch']
  %s0 = inlined_call_operand.vmem [shape: f32[8,32], index: 0, kind: input, shape index: {}]
  %s1 = inlined_call_operand.vmem [shape: f32[32,32], index: 1, kind: input, shape index: {}]
  %s2 = inlined_call_operand.vmem [shape: f32[1,32], index: 2, kind: input, shape index: {}]
  %s3 = inlined_call_operand.vmem [shape: f32[32,8], index: 3, kind: input, shape index: {}]
  %s4 = inlined_call_operand.vmem [shape: f32[1,8], index: 4, kind: input, shape index: {}]
  %s5 = inlined_call_operand.hbm [shape: f32[8,8], index: 5, kind: output, shape index: {}]
  %s6 = sld [smem:[#allocation0]]
  $region30: #{tpu_custom_call.1} parent=0
    _
  %s8 = ssub.s32 1, %s6
  %s9 = scalar_select 0, %s8, %s6
  $region1: #{tpu_custom_call.1} parent=0
    #allocation2 [shape = 'u8[4096]{0}', space=vmem, size = 0x1000, scoped, tag = 'output window, operand 0, single buffered']
    #allocation3 [shape = 's32[1]{0}', space=sflag, size = 0x4, scoped, tag = 'scoped memory for tpu_custom_call.1']
    %10 = vsyncpa [#allocation3], 0
    // Predicated region
    $region2: #{tpu_custom_call.1} parent=1 // pred_check
      _
    $region3: #{tpu_custom_call.1} parent=1 // pred_check_branch
      %12 = sbr.rel (0) target = $region5
    $region4: #{tpu_custom_call.1} parent=1 // pred_region
      _
    $region5: #{tpu_custom_call.1} parent=1 // pred_fallthru
      _
    // Predicated region
    $region6: #{tpu_custom_call.1} parent=1 // pred_check
      _
    $region7: #{tpu_custom_call.1} parent=1 // pred_check_branch
      %14 = sbr.rel (0) target = $region9
    $region8: #{tpu_custom_call.1} parent=1 // pred_region
      _
    $region9: #{tpu_custom_call.1} parent=1 // pred_fallthru
      _
    // Predicated region
    $region10: #{tpu_custom_call.1} parent=1 // pred_check
      _
    $region11: #{tpu_custom_call.1} parent=1 // pred_check_branch
      %16 = sbr.rel (0) target = $region13
    $region12: #{tpu_custom_call.1} parent=1 // pred_region
      _
    $region13: #{tpu_custom_call.1} parent=1 // pred_fallthru
      _
    // Predicated region
    $region14: #{tpu_custom_call.1} parent=1 // pred_check
      _
    $region15: #{tpu_custom_call.1} parent=1 // pred_check_branch
      %18 = sbr.rel (0) target = $region17
    $region16: #{tpu_custom_call.1} parent=1 // pred_region
      _
    $region17: #{tpu_custom_call.1} parent=1 // pred_fallthru
      _
    // Predicated region
    $region18: #{tpu_custom_call.1} parent=1 // pred_check
      _
    $region19: #{tpu_custom_call.1} parent=1 // pred_check_branch
      %20 = sbr.rel (0) target = $region21
    $region20: #{tpu_custom_call.1} parent=1 // pred_region
      _
    $region21: #{tpu_custom_call.1} parent=1 // pred_fallthru
      _
    %v21 = vld [vmem:[%s0] sm:$0xff]
    %v22 = vld [vmem:[%s1] sm:$0xff]
    %v23 = vld [vmem:[%s1 + $0x8] sm:$0xff]
    %v24 = vld [vmem:[%s1 + $0x10] sm:$0xff]
    %v25 = vld [vmem:[%s1 + $0x18] sm:$0xff]
    %v26 = vld [vmem:[%s2] sm:$0x1]
    %v28 = vlaneseq
    %v29 = vshrl.u32 %v28, 7
    %v30 = vsub.s32 0, %v29
    %v31 = vrot.slane %v26, %v30
    %vm33 = vcmask 261120
    %v35 = vsel %vm33, %v21, 0
    %37 = vmatprep.subr.mxu0 0.0
    %38 = vmatpush1.msra.mxu0 %v22
    %39 = vmatprep.subr.mxu0 0.0
    %40 = vmatpush1.msra.mxu0 %v23
    %41 = vmatprep.subr.mxu0 0.0
    %42 = vmatpush1.msra.mxu0 %v24
    %43 = vmatprep.subr.mxu0 0.0
    %44 = vmatpush1.msra.mxu0 %v25
    %45 = vmatprep.subr.mxu0 0.0
    %46 = vmatpush1.msra.mxu0 0.0
    %47 = vmatprep.subr.mxu0 0.0
    %48 = vmatpush1.msra.mxu0 0.0
    %49 = vmatprep.subr.mxu0 0.0
    %50 = vmatpush1.msra.mxu0 0.0
    %51 = vmatprep.subr.mxu0 0.0
    %52 = vmatpush1.msra.mxu0 0.0
    %53 = vmatprep.subr.mxu0 0.0
    %54 = vmatpush1.msra.mxu0 0.0
    %55 = vmatprep.subr.mxu0 0.0
    %56 = vmatpush1.msra.mxu0 0.0
    %57 = vmatprep.subr.mxu0 0.0
    %58 = vmatpush1.msra.mxu0 0.0
    %59 = vmatprep.subr.mxu0 0.0
    %60 = vmatpush1.msra.mxu0 0.0
    %61 = vmatprep.subr.mxu0 0.0
    %62 = vmatpush1.msra.mxu0 0.0
    %63 = vmatprep.subr.mxu0 0.0
    %64 = vmatpush1.msra.mxu0 0.0
    %65 = vmatprep.subr.mxu0 0.0
    %66 = vmatpush1.msra.mxu0 0.0
    %67 = vmatprep.subr.mxu0 0.0
    %68 = vmatpush1.msra.mxu0 0.0
    %69 = vmatprep.subr.mxu0 0.0
    %70 = vmatpush1.msra.mxu0 0.0
    %71 = vmatprep.subr.mxu0 0.0
    %72 = vmatpush1.msra.mxu0 0.0
    %73 = vmatprep.subr.mxu0 0.0
    %74 = vmatpush1.msra.mxu0 0.0
    %75 = vmatprep.subr.mxu0 0.0
    %76 = vmatpush1.msra.mxu0 0.0
    %77 = vmatprep.subr.mxu0 0.0
    %78 = vmatpush1.msra.mxu0 0.0
    %79 = vmatprep.subr.mxu0 0.0
    %80 = vmatpush1.msra.mxu0 0.0
    %81 = vmatprep.subr.mxu0 0.0
    %82 = vmatpush1.msra.mxu0 0.0
    %83 = vmatprep.subr.mxu0 0.0
    %84 = vmatpush1.msra.mxu0 0.0
    %85 = vmatprep.subr.mxu0 0.0
    %86 = vmatpush1.msra.mxu0 0.0
    %87 = vmatprep.subr.mxu0 0.0
    %88 = vmatpush1.msra.mxu0 0.0
    %89 = vmatprep.subr.mxu0 0.0
    %90 = vmatpush1.msra.mxu0 0.0
    %91 = vmatprep.subr.mxu0 0.0
    %92 = vmatpush1.msra.mxu0 0.0
    %93 = vmatprep.subr.mxu0 0.0
    %94 = vmatpush1.msra.mxu0 0.0
    %95 = vmatprep.subr.mxu0 0.0
    %96 = vmatpush1.msra.mxu0 0.0
    %97 = vmatprep.subr.mxu0 0.0
    %98 = vmatpush1.msra.mxu0 0.0
    %99 = vmatprep.subr.mxu0 0.0
    %100 = vmatpush1.msra.mxu0 0.0
    %101 = vmatprep.mubr.f32.mxu0 0.0
    %102 = vmatmul.mubr.f32.gmra.mrb[0].mxu0 %v35
    %v103 = vpop.f32.mrb[0].mxu0
    %v104 = vadd.f32 %v31, %v103
    %v105 = vpop.f32.mrb[0].mxu0
    %106 = vdwg.mxu0
    %v107 = vmax.f32 %v104, 0.0
    %v108 = vld [vmem:[%s3] sm:$0xff]
    %v109 = vld [vmem:[%s3 + $0x8] sm:$0xff]
    %v110 = vld [vmem:[%s3 + $0x10] sm:$0xff]
    %v111 = vld [vmem:[%s3 + $0x18] sm:$0xff]
    %v112 = vld [vmem:[%s4] sm:$0x1]
    %v114 = vlaneseq
    %v115 = vshrl.u32 %v114, 7
    %v116 = vsub.s32 0, %v115
    %v117 = vrot.slane %v112, %v116
    %v120 = vsel %vm33, %v107, 0
    %122 = vmatprep.subr.mxu0 0.0
    %123 = vmatpush1.msra.mxu0 %v108
    %124 = vmatprep.subr.mxu0 0.0
    %125 = vmatpush1.msra.mxu0 %v109
    %126 = vmatprep.subr.mxu0 0.0
    %127 = vmatpush1.msra.mxu0 %v110
    %128 = vmatprep.subr.mxu0 0.0
    %129 = vmatpush1.msra.mxu0 %v111
    %130 = vmatprep.subr.mxu0 0.0
    %131 = vmatpush1.msra.mxu0 0.0
    %132 = vmatprep.subr.mxu0 0.0
    %133 = vmatpush1.msra.mxu0 0.0
    %134 = vmatprep.subr.mxu0 0.0
    %135 = vmatpush1.msra.mxu0 0.0
    %136 = vmatprep.subr.mxu0 0.0
    %137 = vmatpush1.msra.mxu0 0.0
    %138 = vmatprep.subr.mxu0 0.0
    %139 = vmatpush1.msra.mxu0 0.0
    %140 = vmatprep.subr.mxu0 0.0
    %141 = vmatpush1.msra.mxu0 0.0
    %142 = vmatprep.subr.mxu0 0.0
    %143 = vmatpush1.msra.mxu0 0.0
    %144 = vmatprep.subr.mxu0 0.0
    %145 = vmatpush1.msra.mxu0 0.0
    %146 = vmatprep.subr.mxu0 0.0
    %147 = vmatpush1.msra.mxu0 0.0
    %148 = vmatprep.subr.mxu0 0.0
    %149 = vmatpush1.msra.mxu0 0.0
    %150 = vmatprep.subr.mxu0 0.0
    %151 = vmatpush1.msra.mxu0 0.0
    %152 = vmatprep.subr.mxu0 0.0
    %153 = vmatpush1.msra.mxu0 0.0
    %154 = vmatprep.subr.mxu0 0.0
    %155 = vmatpush1.msra.mxu0 0.0
    %156 = vmatprep.subr.mxu0 0.0
    %157 = vmatpush1.msra.mxu0 0.0
    %158 = vmatprep.subr.mxu0 0.0
    %159 = vmatpush1.msra.mxu0 0.0
    %160 = vmatprep.subr.mxu0 0.0
    %161 = vmatpush1.msra.mxu0 0.0
    %162 = vmatprep.subr.mxu0 0.0
    %163 = vmatpush1.msra.mxu0 0.0
    %164 = vmatprep.subr.mxu0 0.0
    %165 = vmatpush1.msra.mxu0 0.0
    %166 = vmatprep.subr.mxu0 0.0
    %167 = vmatpush1.msra.mxu0 0.0
    %168 = vmatprep.subr.mxu0 0.0
    %169 = vmatpush1.msra.mxu0 0.0
    %170 = vmatprep.subr.mxu0 0.0
    %171 = vmatpush1.msra.mxu0 0.0
    %172 = vmatprep.subr.mxu0 0.0
    %173 = vmatpush1.msra.mxu0 0.0
    %174 = vmatprep.subr.mxu0 0.0
    %175 = vmatpush1.msra.mxu0 0.0
    %176 = vmatprep.subr.mxu0 0.0
    %177 = vmatpush1.msra.mxu0 0.0
    %178 = vmatprep.subr.mxu0 0.0
    %179 = vmatpush1.msra.mxu0 0.0
    %180 = vmatprep.subr.mxu0 0.0
    %181 = vmatpush1.msra.mxu0 0.0
    %182 = vmatprep.subr.mxu0 0.0
    %183 = vmatpush1.msra.mxu0 0.0
    %184 = vmatprep.subr.mxu0 0.0
    %185 = vmatpush1.msra.mxu0 0.0
    %186 = vmatprep.mubr.f32.mxu0 0.0
    %187 = vmatmul.mubr.f32.gmra.mrb[0].mxu0 %v120
    %v188 = vpop.f32.mrb[0].mxu0
    %v189 = vadd.f32 %v117, %v188
    %v190 = vpop.f32.mrb[0].mxu0
    %191 = vdwg.mxu0
    %vm192 = vcmask 64512
    %193 = vst.msk [vmem:[#allocation2] sm:$0xff] %vm192, %v189
    // Predicated region
    $region22: #{tpu_custom_call.1} parent=1 // pred_check
      _
    $region23: #{tpu_custom_call.1} parent=1 // pred_check_branch
      %195 = sbr.rel (0) target = $region25
    $region24: #{tpu_custom_call.1} parent=1 // pred_region
      %s197 = ssub.s32 128, 128
      %198 = vsyncadd [#allocation3], %s197
      %s200 = sshll.u32 [#allocation2], 4
      %s201 = int_to_ptr.vmem [resolvable:$true] %s200
      %203 = dma.vmem_to_hbm [thread:$0]  %s201, 128, %s5, [#allocation3]
    $region25: #{tpu_custom_call.1} parent=1 // pred_fallthru
      _
    // Predicated region
    $region26: #{tpu_custom_call.1} parent=1 // pred_check
      _
    $region27: #{tpu_custom_call.1} parent=1 // pred_check_branch
      %205 = sbr.rel (0) target = $region29
    $region28: #{tpu_custom_call.1} parent=1 // pred_region
      %206 = dma.done [#allocation3], 128
    $region29: #{tpu_custom_call.1} parent=1 // pred_fallthru
      _
    %207 = vsyncpa [#allocation3], 1

</llo_original>
